<compile_context>
chip_gen: v7x
topology: tpu7x:2x2x1
jax: 0.10.0
libtpu: 0.0.40
codegen_flags: <defaults>
</compile_context>

<pallas_src>
import functools

import jax
import jax.numpy as jnp
from jax.experimental import pallas as pl
from jax.experimental.pallas import tpu as pltpu


def _focal_terms(x, t, gamma, binary_targets):
    """Per-element (1 - pt)**gamma * BCE in f32 (alpha / mean applied later)."""
    x = x.astype(jnp.float32)
    t = t.astype(jnp.float32)
    # Numerically-stable BCE-with-logits (same form PyTorch uses):
    #   bce = max(x, 0) - x*t + log1p(exp(-|x|))
    e = jnp.exp(-jnp.abs(x))                             # EUP exp #1 (reused)
    bce = jnp.maximum(x, 0.0) - x * t + jnp.log1p(e)     # EUP #2 (log1p)

    if binary_targets:
        # For t in {0, 1}:  pt = exp(-bce) = exp(x*t - max(x,0)) / (1 + e), and
        # exp(x*t - max(x,0)) is 1 when the logit is on the correct side of 0,
        # otherwise e.  With z = (1 - 2t)*x  (z >= 0  <=>  wrong side):
        z = (1.0 - 2.0 * t) * x
        one_minus_pt = jnp.where(z >= 0.0, 1.0, e) / (1.0 + e)
    else:
        one_minus_pt = 1.0 - jnp.exp(-bce)               # soft targets: extra exp

    g = float(gamma)
    if g.is_integer() and 0 <= int(g) <= 8:
        gi = int(g)
        if gi == 0:
            w = jnp.ones_like(bce)
        else:
            w = one_minus_pt
            for _ in range(gi - 1):                      # repeated multiply
                w = w * one_minus_pt
    else:
        w = one_minus_pt ** jnp.float32(g)               # general gamma fallback
    return w * bce


def _focal_single_kernel(x_ref, t_ref, out_ref, *, scale, gamma, binary_targets):
    """Whole problem in one VMEM block: reduce and write the scalar directly."""
    focal = _focal_terms(x_ref[...], t_ref[...], gamma, binary_targets)
    out_ref[0, 0] = jnp.sum(focal) * scale


def _focal_grid_kernel(x_ref, t_ref, out_ref, acc_ref, *, scale, gamma,
                       binary_targets):
    """(parallel, arbitrary) reduction grid with a (1, lanes) accumulator."""
    i = pl.program_id(1)                                 # inner reduction step

    @pl.when(i == 0)
    def _():
        acc_ref[...] = jnp.zeros_like(acc_ref)

    focal = _focal_terms(x_ref[...], t_ref[...], gamma, binary_targets)
    # Sublane (XLU) reduce inside the block; the hot loop never stores a full
    # block back to VMEM and the accumulator stays tiny.
    acc_ref[...] += jnp.sum(focal, axis=0, keepdims=True)

    @pl.when(i == pl.num_programs(1) - 1)
    def _():
        out_ref[...] = acc_ref[...] * scale              # (1, lanes) partial


def _min_sublanes(dtype):
    """Second-minor tile granularity for a dtype (f32: 8, bf16: 16, u8: 32)."""
    return {4: 8, 2: 16, 1: 32}.get(jnp.dtype(dtype).itemsize, 8)


def _pick_layout(total, min_rows):
    """Lane-dense 2-D view (rows, lanes): prefer the widest lane count in
    {4096..128} that both divides `total` and leaves rows a multiple of
    `min_rows` (keeps the pipelined grid path available); otherwise fall back
    to the widest plain divisor."""
    candidates = (4096, 2048, 1024, 512, 256, 128)
    for cand in candidates:
        if total % cand == 0 and (total // cand) % min_rows == 0:
            return total // cand, cand
    for cand in candidates:
        if total % cand == 0:
            return total // cand, cand
    return total // 128, 128


def focal_loss(inputs, targets, alpha=1.0, gamma=2.0, reduction="mean", *,
               binary_targets=True, block_bytes=4 << 20,
               single_block_bytes=512 << 10):
    """Binary focal loss with logits; returns a scalar f32 ('mean' or 'sum').

    Set binary_targets=False if targets are soft (not exactly 0/1)."""
    assert inputs.shape == targets.shape
    if reduction not in ("mean", "sum"):
        # TODO(synk): reduction='none' (elementwise output) not implemented here.
        raise NotImplementedError("only 'mean' and 'sum' reductions are supported")

    total = inputs.size
    # TODO(synk): arbitrary element counts would need pad+mask or a tail block.
    assert total % 128 == 0, "element count must be a multiple of 128"

    min_rows = max(_min_sublanes(inputs.dtype), _min_sublanes(targets.dtype))
    rows, lanes = _pick_layout(total, min_rows)

    scale = float(alpha) / total if reduction == "mean" else float(alpha)

    x2d = inputs.reshape(rows, lanes)    # keep caller dtypes (bf16 / u8 OK);
    t2d = targets.reshape(rows, lanes)   # upcast to f32 only inside the kernel.

    x_bytes = jnp.dtype(inputs.dtype).itemsize
    t_bytes = jnp.dtype(targets.dtype).itemsize
    array_bytes = rows * lanes * x_bytes

    kernel_kwargs = dict(scale=scale, gamma=gamma, binary_targets=binary_targets)

    # Grid-less path only for genuinely small inputs, or when the row count
    # cannot be tiled at this dtype's sublane granularity.
    # TODO(synk): a huge array with rows % min_rows != 0 should be row-padded
    # and masked instead of being loaded whole into VMEM.
    single_block = array_bytes <= single_block_bytes or rows % min_rows != 0

    if single_block:
        kernel = functools.partial(_focal_single_kernel, **kernel_kwargs)
        out = pl.pallas_call(
            kernel,
            out_shape=jax.ShapeDtypeStruct((1, 1), jnp.float32),
            in_specs=[
                pl.BlockSpec(memory_space=pltpu.MemorySpace.VMEM),
                pl.BlockSpec(memory_space=pltpu.MemorySpace.VMEM),
            ],
            out_specs=pl.BlockSpec(memory_space=pltpu.MemorySpace.SMEM),
        )(x2d, t2d)
        return out[0, 0]

    # Pipelined reduction grid.  Pick the largest row tile that is a multiple
    # of min_rows, divides rows, and keeps one logits block near block_bytes.
    target_rows = max(min_rows, min(rows, block_bytes // (lanes * x_bytes)))
    row_tile = min_rows
    cand = (target_rows // min_rows) * min_rows
    while cand >= min_rows:
        if rows % cand == 0:
            row_tile = cand
            break
        cand -= min_rows
    num_tiles = rows // row_tile

    # Leading "parallel" axis: on multi-TensorCore chips (v7x) the two halves
    # of the reduction run on different cores; on v5e/v6e it just nests loops.
    n_split = 2 if (num_tiles >= 2 and num_tiles % 2 == 0) else 1
    tiles_per_split = num_tiles // n_split

    per_step_bytes = row_tile * lanes * (x_bytes + t_bytes)
    est_vmem = 2 * per_step_bytes + lanes * 4 + (64 << 10)   # 2x double-buffered
    cparams = dict(dimension_semantics=("parallel", "arbitrary"))
    if est_vmem > (30 << 20):
        cparams["vmem_limit_bytes"] = min(int(est_vmem * 5 // 4), 100 << 20)

    kernel = functools.partial(_focal_grid_kernel, **kernel_kwargs)
    out = pl.pallas_call(
        kernel,
        out_shape=jax.ShapeDtypeStruct((n_split, 1, lanes), jnp.float32),
        grid_spec=pltpu.PrefetchScalarGridSpec(
            num_scalar_prefetch=0,
            grid=(n_split, tiles_per_split),
            in_specs=[
                pl.BlockSpec((row_tile, lanes),
                             lambda c, i: (c * tiles_per_split + i, 0)),
                pl.BlockSpec((row_tile, lanes),
                             lambda c, i: (c * tiles_per_split + i, 0)),
            ],
            # Leading dim squeezed: each split writes its own (1, lanes) partial.
            out_specs=pl.BlockSpec((None, 1, lanes), lambda c, i: (c, 0, 0)),
            scratch_shapes=[pltpu.VMEM((1, lanes), jnp.float32)],
        ),
        compiler_params=pltpu.CompilerParams(**cparams),
    )(x2d, t2d)
    # Partials already carry the alpha / N scaling; final tiny reduce in XLA.
    return jnp.sum(out)


def focal_loss_ref(inputs, targets, alpha=1.0, gamma=2.0):
    x = inputs.astype(jnp.float32)
    t = targets.astype(jnp.float32)
    bce = jnp.maximum(x, 0.0) - x * t + jnp.log1p(jnp.exp(-jnp.abs(x)))
    pt = jnp.exp(-bce)
    return jnp.mean(alpha * (1.0 - pt) ** gamma * bce)


if __name__ == "__main__":
    key = jax.random.PRNGKey(0)
    k1, k2, k3, k4 = jax.random.split(key, 4)

    # 1) Small NCHW segmentation-logit shape -> grid-less single-block path.
    B, C, H, W = 2, 4, 16, 16
    x1 = jax.random.normal(k1, (B, C, H, W), dtype=jnp.float32)
    t1 = (jax.random.uniform(k2, (B, C, H, W)) > 0.5).astype(jnp.float32)
    loss1 = jax.block_until_ready(focal_loss(x1, t1, alpha=1.0, gamma=2.0))
    ref1 = focal_loss_ref(x1, t1, 1.0, 2.0)
    assert jnp.allclose(loss1, ref1, rtol=5e-5, atol=1e-6), (loss1, ref1)

    # 2) Larger input with a small block budget -> exercises the pipelined
    #    (parallel, arbitrary) reduction grid with two partial sums.
    B2, C2, H2, W2 = 2, 8, 128, 128
    x2 = jax.random.normal(k3, (B2, C2, H2, W2), dtype=jnp.float32)
    t2 = (jax.random.uniform(k4, (B2, C2, H2, W2)) > 0.5).astype(jnp.float32)
    loss2 = jax.block_until_ready(
        focal_loss(x2, t2, alpha=1.0, gamma=2.0, block_bytes=128 << 10))
    ref2 = focal_loss_ref(x2, t2, 1.0, 2.0)
    assert jnp.allclose(loss2, ref2, rtol=5e-5, atol=1e-6), (loss2, ref2)

    # 3) Reduced-HBM-bytes dtypes: bf16 logits + uint8 {0,1} targets.
    x3 = x1.astype(jnp.bfloat16)
    t3 = t1.astype(jnp.uint8)
    loss3 = jax.block_until_ready(focal_loss(x3, t3, alpha=1.0, gamma=2.0))
    ref3 = focal_loss_ref(x3, t3, 1.0, 2.0)
    assert jnp.allclose(loss3, ref3, rtol=5e-5, atol=1e-6), (loss3, ref3)

    print("KERNEL_OK")
</pallas_src>

<mosaic_0001>
module attributes {stable_mosaic.version = 11 : i64} {
  func.func @_focal_single_kernel(%arg0: memref<8x256xf32, #tpu.memory_space<vmem>>, %arg1: memref<8x256xf32, #tpu.memory_space<vmem>>, %arg2: memref<1x1xf32, #tpu.memory_space<smem>>) attributes {dimension_semantics = [], scalar_prefetch = 0 : i64, scratch_operands = 0 : i64, tpu.core_type = #tpu.core_type<tc>} {
    %c0 = arith.constant 0 : index
    %c0_0 = arith.constant 0 : index
    %0 = vector.load %arg0[%c0, %c0_0] : memref<8x256xf32, #tpu.memory_space<vmem>>, vector<8x256xf32>
    %c0_1 = arith.constant 0 : index
    %c0_2 = arith.constant 0 : index
    %1 = vector.load %arg1[%c0_1, %c0_2] : memref<8x256xf32, #tpu.memory_space<vmem>>, vector<8x256xf32>
    %2 = math.absf %0 : vector<8x256xf32>
    %cst = arith.constant 0.000000e+00 : f32
    %3 = vector.broadcast %cst : f32 to vector<8x256xf32>
    %4 = arith.subf %3, %2 : vector<8x256xf32>
    %5 = math.exp %4 : vector<8x256xf32>
    %cst_3 = arith.constant 0.000000e+00 : f32
    %6 = vector.broadcast %cst_3 : f32 to vector<8x256xf32>
    %7 = arith.maximumf %0, %6 : vector<8x256xf32>
    %8 = arith.mulf %0, %1 : vector<8x256xf32>
    %9 = arith.subf %7, %8 : vector<8x256xf32>
    %10 = math.log1p %5 : vector<8x256xf32>
    %11 = arith.addf %9, %10 : vector<8x256xf32>
    %cst_4 = arith.constant 2.000000e+00 : f32
    %12 = vector.broadcast %cst_4 : f32 to vector<8x256xf32>
    %13 = arith.mulf %12, %1 : vector<8x256xf32>
    %cst_5 = arith.constant 1.000000e+00 : f32
    %14 = vector.broadcast %cst_5 : f32 to vector<8x256xf32>
    %15 = arith.subf %14, %13 : vector<8x256xf32>
    %16 = arith.mulf %15, %0 : vector<8x256xf32>
    %cst_6 = arith.constant 0.000000e+00 : f32
    %17 = vector.broadcast %cst_6 : f32 to vector<8x256xf32>
    %18 = arith.cmpf oge, %16, %17 : vector<8x256xf32>
    %cst_7 = arith.constant 1.000000e+00 : f32
    %19 = vector.broadcast %cst_7 : f32 to vector<8x256xf32>
    %20 = arith.select %18, %19, %5 : vector<8x256xi1>, vector<8x256xf32>
    %cst_8 = arith.constant 1.000000e+00 : f32
    %21 = vector.broadcast %cst_8 : f32 to vector<8x256xf32>
    %22 = arith.addf %21, %5 : vector<8x256xf32>
    %23 = arith.divf %20, %22 : vector<8x256xf32>
    %24 = arith.mulf %23, %23 : vector<8x256xf32>
    %25 = arith.mulf %24, %11 : vector<8x256xf32>
    %26 = vector.shape_cast %25 : vector<8x256xf32> to vector<1x8x256xf32>
    %cst_9 = arith.constant dense<0.000000e+00> : vector<1xf32>
    %27 = vector.multi_reduction <add>, %26, %cst_9 [1, 2] : vector<1x8x256xf32> to vector<1xf32>
    %28 = vector.shape_cast %27 : vector<1xf32> to vector<1x1x1xf32>
    %29 = vector.extract %28[0, 0, 0] : f32 from vector<1x1x1xf32>
    %cst_10 = arith.constant 4.8828125E-4 : f32
    %30 = arith.mulf %29, %cst_10 : f32
    %c0_11 = arith.constant 0 : index
    %c0_12 = arith.constant 0 : index
    %31 = memref.load %arg2[%c0_11, %c0_12] : memref<1x1xf32, #tpu.memory_space<smem>>
    memref.store %30, %arg2[%c0_11, %c0_12] : memref<1x1xf32, #tpu.memory_space<smem>>
    return
  }
}

</mosaic_0001>

<llo_original>
// kernel: tpu_custom_call.1
$region0: #{tpu_custom_call.1}
  #allocation0 [shape = 'u32[]', space=smem, size = 0x4, offset = 0x4, fixed_abs, tag = 'smem constant byte address 0x4 - core index']
  #allocation1 [shape = 'u32[144,128]{1,0:T(1,128)}', space=vmem, size = 0x12000, scoped, tag = 'internal scratch']
  %s0 = inlined_call_operand.hbm [shape: f32[8,256], index: 0, kind: input, shape index: {}]
  %s1 = inlined_call_operand.hbm [shape: f32[8,256], index: 1, kind: input, shape index: {}]
  %s2 = inlined_call_operand.hbm [shape: f32[1,1], index: 2, kind: output, shape index: {}]
  %s3 = sld [smem:[#allocation0]]
  $region26: #{tpu_custom_call.1} parent=0
    _
  %s5 = ssub.s32 1, %s3
  %s6 = scalar_select 0, %s5, %s3
  $region1: #{tpu_custom_call.1} parent=0
    #allocation2 [shape = 'u8[8192]{0}', space=vmem, size = 0x2000, scoped, tag = 'input window, operand 0, single buffered']
    #allocation3 [shape = 's32[1]{0}', space=sflag, size = 0x4, scoped, tag = 'scoped memory for tpu_custom_call.1']
    #allocation4 [shape = 's32[1]{0}', space=sflag, size = 0x4, scoped, tag = 'scoped memory for tpu_custom_call.1']
    #allocation5 [shape = 'u8[8192]{0}', space=vmem, size = 0x2000, scoped, tag = 'input window, operand 1, single buffered']
    #allocation6 [shape = 's32[1]{0}', space=sflag, size = 0x4, scoped, tag = 'scoped memory for tpu_custom_call.1']
    #allocation7 [shape = 'u8[512]{0}', space=smem, size = 0x200, scoped, tag = 'output window, operand 0, single buffered']
    %7 = vsyncpa [#allocation3], 0
    %8 = vsyncpa [#allocation6], 0
    %9 = vsyncpa [#allocation4], 0
    // Predicated region
    $region2: #{tpu_custom_call.1} parent=1 // pred_check
      _
    $region3: #{tpu_custom_call.1} parent=1 // pred_check_branch
      %11 = sbr.rel (0) target = $region5
    $region4: #{tpu_custom_call.1} parent=1 // pred_region
      %s13 = ssub.s32 256, 256
      %14 = vsyncadd [#allocation3], %s13
      %s16 = sshll.u32 [#allocation2], 4
      %s17 = int_to_ptr.vmem [resolvable:$true] %s16
      %19 = dma.hbm_to_vmem [thread:$0]  %s0, 256, %s17, [#allocation3]
    $region5: #{tpu_custom_call.1} parent=1 // pred_fallthru
      _
    // Predicated region
    $region6: #{tpu_custom_call.1} parent=1 // pred_check
      _
    $region7: #{tpu_custom_call.1} parent=1 // pred_check_branch
      %21 = sbr.rel (0) target = $region9
    $region8: #{tpu_custom_call.1} parent=1 // pred_region
      %s23 = ssub.s32 256, 256
      %24 = vsyncadd [#allocation6], %s23
      %s26 = sshll.u32 [#allocation5], 4
      %s27 = int_to_ptr.vmem [resolvable:$true] %s26
      %29 = dma.hbm_to_vmem [thread:$0]  %s1, 256, %s27, [#allocation6]
    $region9: #{tpu_custom_call.1} parent=1 // pred_fallthru
      _
    // Predicated region
    $region10: #{tpu_custom_call.1} parent=1 // pred_check
      _
    $region11: #{tpu_custom_call.1} parent=1 // pred_check_branch
      %31 = sbr.rel (0) target = $region13
    $region12: #{tpu_custom_call.1} parent=1 // pred_region
      %32 = dma.done [#allocation3], 256
    $region13: #{tpu_custom_call.1} parent=1 // pred_fallthru
      _
    // Predicated region
    $region14: #{tpu_custom_call.1} parent=1 // pred_check
      _
    $region15: #{tpu_custom_call.1} parent=1 // pred_check_branch
      %34 = sbr.rel (0) target = $region17
    $region16: #{tpu_custom_call.1} parent=1 // pred_region
      %35 = dma.done [#allocation6], 256
    $region17: #{tpu_custom_call.1} parent=1 // pred_fallthru
      _
    %v36 = vld [vmem:[#allocation2] sm:$0xff]
    %v37 = vld [vmem:[#allocation2 + $0x8] sm:$0xff]
    %v38 = vld [vmem:[#allocation5] sm:$0xff]
    %v39 = vld [vmem:[#allocation5 + $0x8] sm:$0xff]
    %v40 = vand.u32 2147483647, %v36
    %v41 = vand.u32 2147483647, %v37
    %v42 = vsub.f32 0.0, %v40
    %v43 = vsub.f32 0.0, %v41
    %v44 = vmul.f32 %v42, 1.442695
    %v45 = vpow.pop %v44
    %v46 = vmul.f32 %v43, 1.442695
    %v47 = vpow.pop %v46
    %v48 = vmax.f32 %v36, 0.0
    %v49 = vmax.f32 %v37, 0.0
    %v50 = vmul.f32 %v36, %v38
    %v51 = vmul.f32 %v37, %v39
    %v52 = vsub.f32 %v48, %v50
    %v53 = vsub.f32 %v49, %v51
    %v54 = vadd.f32 %v45, 1.0
    %v55 = vlog2.pop %v54
    %v56 = vmul.f32 %v55, 0.6931472
    %v57 = vmul.f32 -0.5, %v45
    %v58 = vadd.f32 %v57, 1.0
    %v59 = vmul.f32 %v58, %v45
    %v60 = vand.u32 2147483647, %v45
    %vm61 = vcmp.lt.f32.partialorder %v60, 0.0004427343
    %v62 = vsel %vm61, %v59, %v56
    %v63 = vadd.f32 %v47, 1.0
    %v64 = vlog2.pop %v63
    %v65 = vmul.f32 %v64, 0.6931472
    %v66 = vmul.f32 -0.5, %v47
    %v67 = vadd.f32 %v66, 1.0
    %v68 = vmul.f32 %v67, %v47
    %v69 = vand.u32 2147483647, %v47
    %vm70 = vcmp.lt.f32.partialorder %v69, 0.0004427343
    %v71 = vsel %vm70, %v68, %v65
    %v72 = vadd.f32 %v52, %v62
    %v73 = vadd.f32 %v53, %v71
    %v74 = vmul.f32 %v38, 2.0
    %v75 = vmul.f32 %v39, 2.0
    %v76 = vsub.f32 1.0, %v74
    %v77 = vsub.f32 1.0, %v75
    %v78 = vmul.f32 %v76, %v36
    %v79 = vmul.f32 %v77, %v37
    %vm80 = vcmp.ge.f32.partialorder %v78, 0.0
    %vm81 = vcmp.ge.f32.partialorder %v79, 0.0
    %v82 = vsel %vm80, 1.0, %v45
    %v83 = vsel %vm81, 1.0, %v47
    %v84 = vadd.f32 %v45, 1.0
    %v85 = vadd.f32 %v47, 1.0
    %v86 = vrcp.pop %v84
    %v87 = vmul.f32 %v82, %v86
    %v88 = vrcp.pop %v85
    %v89 = vmul.f32 %v83, %v88
    %v90 = vmul.f32 %v87, %v87
    %v91 = vmul.f32 %v89, %v89
    %v92 = vmul.f32 %v90, %v72
    %v93 = vmul.f32 %v91, %v73
    %v94 = vadd.f32 %v92, %v93
    %95 = vadd.xlane.f32.xlu0 %v94
    %v96 = vpop.xlane.xlu0 %95
    %v97 = vrot.slane %v96, 4
    %v98 = vadd.f32 %v96, %v97
    %v99 = vrot.slane %v98, 2
    %v100 = vadd.f32 %v98, %v99
    %v101 = vrot.slane %v100, 1
    %v102 = vadd.f32 %v100, %v101
    %s103 = vtos %v102
    %s104 = smul.f32 %s103, 0.00048828125
    %s105 = scalar_lea.smem [#allocation7], 0
    %106 = sst [smem:[%s105]] %s104
    // Predicated region
    $region18: #{tpu_custom_call.1} parent=1 // pred_check
      _
    $region19: #{tpu_custom_call.1} parent=1 // pred_check_branch
      %108 = sbr.rel (0) target = $region21
    $region20: #{tpu_custom_call.1} parent=1 // pred_region
      %s110 = ssub.s32 16, 16
      %111 = vsyncadd [#allocation4], %s110
      %114 = dma.smem_to_hbm [#allocation7], 16, %s2, [#allocation4]
    $region21: #{tpu_custom_call.1} parent=1 // pred_fallthru
      _
    // Predicated region
    $region22: #{tpu_custom_call.1} parent=1 // pred_check
      _
    $region23: #{tpu_custom_call.1} parent=1 // pred_check_branch
      %116 = sbr.rel (0) target = $region25
    $region24: #{tpu_custom_call.1} parent=1 // pred_region
      %117 = dma.done [#allocation4], 16
    $region25: #{tpu_custom_call.1} parent=1 // pred_fallthru
      _
    %118 = sfence
    %119 = vsyncpa [#allocation3], 1
    %120 = vsyncpa [#allocation6], 1
    %121 = vsyncpa [#allocation4], 1

</llo_original>
